<compile_context>
chip_gen: v6e
topology: v6e:2x2x1
jax: 0.10.0
libtpu: 0.0.40
codegen_flags: <defaults>
</compile_context>

<pallas_src>
import jax
import jax.numpy as jnp
import numpy as np
from jax.experimental import pallas as pl
from jax.experimental.pallas import tpu as pltpu

# Constant reciprocals (fold constant divides into multiplies).
_INV_1_7044706 = 1.0 / 1.7044706
_INV_0_5268826 = 1.0 / 0.5268826
_INV_0_7328953 = 1.0 / 0.7328953


def _round_up(x, m):
    return ((x + m - 1) // m) * m


def _flocking_kernel(first_ref, nblk_ref, d_ref, dst_ref, out_ref, msg_ref, acc_ref):
    """One (node_tile i, local edge block k) grid step.

    first_ref : (n_tiles,) i32 SMEM  first edge block owned by node tile i
    nblk_ref  : (n_tiles,) i32 SMEM  number of edge blocks owned by node tile i
    d_ref     : (4, e_tile) f32      per-edge h_i - h_j (edges on lanes, sorted by dst)
    dst_ref   : (1, e_tile) i32      destination node per edge (lane-dense; -1 = padding)
    out_ref   : (2, n_tile) f32      predictions (nodes on lanes)
    msg_ref   : (8, e_tile) f32      scratch MXU LHS (rows 0-3 msg, row 4 ones, rows 5-7 zero)
    acc_ref   : (8, n_tile) f32      scratch accumulator (rows 0-3 scatter sums, row 4 in-degree)
    """
    i = pl.program_id(0)
    k = pl.program_id(1)
    n_tile = out_ref.shape[1]
    e_tile = d_ref.shape[1]

    @pl.when(k == 0)
    def _init():
        acc_ref[...] = jnp.zeros_like(acc_ref)

    # CSR routing: only the blocks that actually hold this tile's edges do work.
    # (The clamped/ragged trailing steps re-map to the same block; skipping them
    #  is required so those edges are not double-counted.)
    @pl.when(k < nblk_ref[i])
    def _work():
        # ---- message (per edge, lane-dense elementwise on the VPU) ----------
        d = d_ref[...]                                   # (4, e_tile)
        x0 = d[0:1, :]
        x1 = d[1:2, :]

        m0 = (x0 - x1 / ((x0 * 0.07104663) ** 2 + 1.536996)) * -0.028956918
        m1 = (x0 - x1 * (0.8290067 - (x0 * -0.021992652) ** 2)) * 0.025425926
        m2 = (x0 - (x0 * -0.083299406) ** 2) * -0.024002103 - 0.22298379
        m3 = (x1 + 2.6200492 + x0 * -0.16023761) * 0.025031794

        # msg[(h_i - h_j == 0).all(dim=1)] = 0  -- elementwise AND, no cross-lane reduce.
        zero_row = ((d[0:1, :] == 0.0) & (d[1:2, :] == 0.0)
                    & (d[2:3, :] == 0.0) & (d[3:4, :] == 0.0))
        keep = jnp.where(zero_row, 0.0, 1.0)

        # Pre-tiled (8, e_tile) MXU LHS written row-by-row (no per-step concat repack).
        msg_ref[0:1, :] = m0 * keep
        msg_ref[1:2, :] = m1 * keep
        msg_ref[2:3, :] = m2 * keep
        msg_ref[3:4, :] = m3 * keep
        msg_ref[4:5, :] = jnp.ones((1, e_tile), jnp.float32)    # in-degree row
        msg_ref[5:8, :] = jnp.zeros((3, e_tile), jnp.float32)   # MXU padding rows

        # ---- scatter-add as an in-kernel one-hot matmul on the MXU ----------
        # Rebased compare: subtract node_base from the e_tile dst values and
        # compare against a constant sublane iota (nodes on sublanes).
        node_base = i * n_tile
        rel = dst_ref[...] - node_base                   # (1, e_tile) i32
        node_iota = jax.lax.broadcasted_iota(jnp.int32, (n_tile, e_tile), 0)
        s = (node_iota == rel).astype(jnp.float32)       # (n_tile, e_tile)

        # Contract the shared lane (edge) dim:  (8, e) x (n, e)^T -> (8, n).
        acc_ref[...] += jax.lax.dot_general(
            msg_ref[...], s,
            dimension_numbers=(((1,), (1,)), ((), ())),
            preferred_element_type=jnp.float32,
            precision=jax.lax.Precision.HIGHEST)

    # ---- finalize: aggregate split, per-node update, prediction head --------
    @pl.when(k == pl.num_programs(1) - 1)
    def _finalize():
        sums = acc_ref[...]                              # (8, n_tile)
        cnt = sums[4:5, :]
        inv_cnt = 1.0 / jnp.maximum(cnt, 1.0)
        # aggregate = cat([add(msg[:, 2:4]), mean(msg[:, 0:2])], dim=1)
        a0 = sums[2:3, :]
        a1 = sums[3:4, :]
        a2 = sums[0:1, :] * inv_cnt
        a3 = sums[1:2, :] * inv_cnt

        u0 = (a0 - (a3 + (a2 * 0.15994334) ** 2) * _INV_1_7044706 - a2) * 0.16596459
        u1 = (a1 - (a2 * -0.089175865) ** 2 * a3 - a2 + a3) * -0.05459863
        u2 = (a3 + a0) * 0.05392959
        u3 = a2 * (12.305774 / (a2 ** 2 + 63.129406))

        p0 = ((u0 * _INV_0_5268826 + u3 - u2) * -0.18549965 - (u1 + u2)) * _INV_0_7328953
        p1 = u0 * -0.8037861 - u1 + (u3 * 1.2175907 + u2)
        out_ref[...] = jnp.concatenate([p0, p1], axis=0)          # (2, n_tile)


def flocking_model(pos, vel, edge_index, *, node_tile=None, edge_tile=None):
    """pos, vel: (N, 2) float.  edge_index: (2, E) int, row 0 = src (j), row 1 = dst (i).

    edge_index must be concrete (the CSR edge-block routing tables are computed
    host-side with numpy before launching the kernel).
    """
    pos = jnp.asarray(pos, jnp.float32)
    vel = jnp.asarray(vel, jnp.float32)
    h = jnp.concatenate([pos, vel], axis=-1)              # (N, 4)
    N = h.shape[0]

    src = np.asarray(edge_index[0], dtype=np.int32)
    dst = np.asarray(edge_index[1], dtype=np.int32)
    E = int(src.shape[0])

    # Lane-dense tiles (multiples of 128).  node_tile=256 keeps >=2 "parallel"
    # blocks (both v7x TensorCores busy) whenever N > 256; edge_tile=1024 cuts
    # grid-step overhead; VMEM footprint stays ~2 MiB.
    if node_tile is None:
        node_tile = min(256, _round_up(N, 128))
    if edge_tile is None:
        edge_tile = min(1024, _round_up(max(E, 1), 128))
    n_pad = _round_up(N, node_tile)
    e_pad = _round_up(max(E, 1), edge_tile)
    n_tiles = n_pad // node_tile

    # ---- CSR edge-block routing (host side): sort edges by dst so each node
    # tile only visits the edge blocks containing its incoming edges. ---------
    order = np.argsort(dst, kind="stable")
    dst_sorted = dst[order].astype(np.int64)
    tile_lo = np.arange(n_tiles, dtype=np.int64) * node_tile
    starts = np.searchsorted(dst_sorted, tile_lo, side="left")
    ends = np.searchsorted(dst_sorted, tile_lo + node_tile, side="left")
    has_edges = ends > starts
    first_blk = np.where(has_edges, starts // edge_tile, 0).astype(np.int32)
    last_blk = np.where(has_edges, (np.maximum(ends, 1) - 1) // edge_tile, 0).astype(np.int32)
    num_blk = np.where(has_edges, last_blk - first_blk + 1, 0).astype(np.int32)
    max_blocks = max(int(num_blk.max()), 1)

    # ---- transposed, lane-dense operands (gather from h.T + pad; no zero-init
    # scatter-set).  Padded edges get dst = -1 so they match no node. ---------
    dst_j = jnp.asarray(dst[order], dtype=jnp.int32)
    src_j = jnp.asarray(src[order], dtype=jnp.int32)
    ht = h.T                                              # (4, N)
    d_t = ht[:, dst_j] - ht[:, src_j]                     # (4, E)
    d_t = jnp.pad(d_t, ((0, 0), (0, e_pad - E)))
    dst_row = jnp.pad(dst_j, (0, e_pad - E), constant_values=-1).reshape(1, e_pad)
    # TODO(synk): gather h[dst]-h[src] in-kernel (scalar-prefetched indices with
    # a VMEM-resident (4, N) h) to drop this (4, e_pad) HBM intermediate.

    def edge_block(i, k, first_ref, nblk_ref):
        # Data-dependent edge-block index; clamped so ragged tail steps re-map
        # to a valid, already-fetched block (compute is gated off in-kernel).
        return first_ref[i] + jnp.minimum(k, jnp.maximum(nblk_ref[i] - 1, 0))

    total_work = max(int(num_blk.sum()), 1)
    cost = pl.CostEstimate(
        flops=int(2 * 8 * node_tile * edge_tile * total_work + 40 * e_pad),
        transcendentals=0,
        bytes_accessed=int(4 * (d_t.size + dst_row.size + 2 * n_pad)),
    )

    out = pl.pallas_call(
        _flocking_kernel,
        out_shape=jax.ShapeDtypeStruct((2, n_pad), jnp.float32),
        grid_spec=pltpu.PrefetchScalarGridSpec(
            num_scalar_prefetch=2,
            grid=(n_tiles, max_blocks),
            in_specs=[
                pl.BlockSpec((4, edge_tile),
                             lambda i, k, f, nb: (0, edge_block(i, k, f, nb))),
                pl.BlockSpec((1, edge_tile),
                             lambda i, k, f, nb: (0, edge_block(i, k, f, nb))),
            ],
            out_specs=pl.BlockSpec((2, node_tile), lambda i, k, f, nb: (0, i)),
            scratch_shapes=[
                pltpu.VMEM((8, edge_tile), jnp.float32),   # msg (MXU LHS)
                pltpu.VMEM((8, node_tile), jnp.float32),   # accumulator
            ],
        ),
        compiler_params=pltpu.CompilerParams(
            dimension_semantics=("parallel", "arbitrary")),
        cost_estimate=cost,
    )(jnp.asarray(first_blk), jnp.asarray(num_blk), d_t, dst_row)

    return out[:, :N].T                                   # (N, 2)


# --- pure-JAX reference (forward-pass semantics of the PyTorch module) -------
def _reference(pos, vel, edge_index):
    h = jnp.concatenate([pos, vel], axis=-1).astype(jnp.float32)
    N = h.shape[0]
    src, dst = edge_index[0], edge_index[1]
    h_i, h_j = h[dst], h[src]
    d = h_i - h_j
    x0, x1 = d[:, 0:1], d[:, 1:2]
    m0 = (x0 - x1 / ((x0 * 0.07104663) ** 2 + 1.536996)) * -0.028956918
    m1 = (x0 - x1 * (0.8290067 - (x0 * -0.021992652) ** 2)) * 0.025425926
    m2 = (x0 - (x0 * -0.083299406) ** 2) * -0.024002103 - 0.22298379
    m3 = (x1 + 2.6200492 + x0 * -0.16023761) * 0.025031794
    msg = jnp.concatenate([m0, m1, m2, m3], axis=1)
    msg = jnp.where(jnp.all(d == 0.0, axis=1, keepdims=True), 0.0, msg)
    sums = jax.ops.segment_sum(msg, dst, num_segments=N)
    cnt = jax.ops.segment_sum(jnp.ones((msg.shape[0], 1), jnp.float32), dst, num_segments=N)
    a = jnp.concatenate([sums[:, 2:4], sums[:, 0:2] / jnp.maximum(cnt, 1.0)], axis=1)
    a0, a1, a2, a3 = a[:, 0:1], a[:, 1:2], a[:, 2:3], a[:, 3:4]
    u0 = (a0 - (a3 + (a2 * 0.15994334) ** 2) / 1.7044706 - a2) * 0.16596459
    u1 = (a1 - (a2 * -0.089175865) ** 2 * a3 - a2 + a3) * -0.05459863
    u2 = (a3 + a0) * 0.05392959
    u3 = a2 * (12.305774 / (a2 ** 2 - (-63.129406)))
    p0 = ((u0 / 0.5268826 + u3 - u2) * -0.18549965 - (u1 + u2)) / 0.7328953
    p1 = u0 * -0.8037861 - u1 + (u3 * 1.2175907 + u2)
    return jnp.concatenate([p0, p1], axis=1)


if __name__ == "__main__":
    key = jax.random.PRNGKey(0)
    k_pos, k_vel, k_rest = jax.random.split(key, 3)

    # -- test 1: small deterministic ring graph (N=16 agents, 4 neighbours) --
    N, K = 16, 4
    pos = jax.random.normal(k_pos, (N, 2), dtype=jnp.float32)
    vel = jax.random.normal(k_vel, (N, 2), dtype=jnp.float32)
    dst = np.repeat(np.arange(N), K)
    src = (np.tile(np.arange(1, K + 1), N) + dst) % N
    edge_index = jnp.asarray(np.stack([src, dst], axis=0), dtype=jnp.int32)  # (2, 64)

    pred = jax.block_until_ready(flocking_model(pos, vel, edge_index))
    ref = _reference(pos, vel, edge_index)
    assert pred.shape == (N, 2) and pred.dtype == jnp.float32
    np.testing.assert_allclose(np.asarray(pred), np.asarray(ref), rtol=1e-4, atol=1e-5)

    # -- test 2: larger random graph (2 node tiles, multiple edge blocks, CSR
    #            routing with a shared block, plus self-loops exercising the
    #            zero-difference mask) ---------------------------------------
    N2, E2 = 300, 2000
    k1, k2, k3, k4 = jax.random.split(k_rest, 4)
    pos2 = jax.random.normal(k1, (N2, 2), dtype=jnp.float32)
    vel2 = jax.random.normal(k2, (N2, 2), dtype=jnp.float32)
    src2 = np.asarray(jax.random.randint(k3, (E2,), 0, N2, dtype=jnp.int32))
    dst2 = np.asarray(jax.random.randint(k4, (E2,), 0, N2, dtype=jnp.int32))
    loops = np.arange(50, dtype=np.int32)                 # 50 self-loops (h_i - h_j == 0)
    edge_index2 = jnp.asarray(
        np.stack([np.concatenate([src2, loops]), np.concatenate([dst2, loops])], axis=0),
        dtype=jnp.int32)                                  # (2, 2050)

    pred2 = jax.block_until_ready(flocking_model(pos2, vel2, edge_index2))
    ref2 = _reference(pos2, vel2, edge_index2)
    np.testing.assert_allclose(np.asarray(pred2), np.asarray(ref2), rtol=1e-4, atol=1e-5)

    # -- test 3: a node tile with zero incoming edges (num_blk == 0 path) ----
    N3, E3 = 300, 500
    k5, k6, k7, k8 = jax.random.split(k1, 4)
    pos3 = jax.random.normal(k5, (N3, 2), dtype=jnp.float32)
    vel3 = jax.random.normal(k6, (N3, 2), dtype=jnp.float32)
    src3 = jax.random.randint(k7, (E3,), 0, N3, dtype=jnp.int32)
    dst3 = jax.random.randint(k8, (E3,), 0, 100, dtype=jnp.int32)   # all dst < 100
    edge_index3 = jnp.stack([src3, dst3], axis=0)

    pred3 = jax.block_until_ready(flocking_model(pos3, vel3, edge_index3))
    ref3 = _reference(pos3, vel3, edge_index3)
    np.testing.assert_allclose(np.asarray(pred3), np.asarray(ref3), rtol=1e-4, atol=1e-5)

    print("KERNEL_OK")
</pallas_src>

<mosaic_0001>
module attributes {stable_mosaic.version = 11 : i64} {
  func.func @_flocking_kernel(%arg0: i32, %arg1: i32, %arg2: memref<1xi32, #tpu.memory_space<smem>>, %arg3: memref<1xi32, #tpu.memory_space<smem>>, %arg4: memref<4x128xf32, #tpu.memory_space<vmem>>, %arg5: memref<1x128xi32, #tpu.memory_space<vmem>>, %arg6: memref<2x128xf32, #tpu.memory_space<vmem>>, %arg7: memref<8x128xf32, #tpu.memory_space<vmem>>, %arg8: memref<8x128xf32, #tpu.memory_space<vmem>>) attributes {dimension_semantics = [#tpu.dimension_semantics<parallel>, #tpu.dimension_semantics<arbitrary>], iteration_bounds = array<i64: 1, 1>, scalar_prefetch = 2 : i64, scratch_operands = 2 : i64, tpu.core_type = #tpu.core_type<tc>, window_params = [{transform_indices = @transform_0, window_bounds = array<i64: 4, 128>}, {transform_indices = @transform_1, window_bounds = array<i64: 1, 128>}, {transform_indices = @transform_2, window_bounds = array<i64: 2, 128>}]} {
    %c0_i32 = arith.constant 0 : i32
    %0 = arith.cmpi eq, %arg1, %c0_i32 : i32
    %1 = arith.extui %0 : i1 to i32
    %c0_i32_0 = arith.constant 0 : i32
    %2 = arith.cmpi ne, %1, %c0_i32_0 : i32
    scf.if %2 {
      %cst = arith.constant 0.000000e+00 : f32
      %11 = vector.broadcast %cst : f32 to vector<8x128xf32>
      %c0 = arith.constant 0 : index
      %c0_4 = arith.constant 0 : index
      %12 = vector.load %arg8[%c0, %c0_4] : memref<8x128xf32, #tpu.memory_space<vmem>>, vector<8x128xf32>
      tpu.vector_store %arg8[%c0, %c0_4], %11 {strides = array<i32>} : memref<8x128xf32, #tpu.memory_space<vmem>>, vector<8x128xf32>,
    } else {
    }
    %3 = arith.index_cast %arg0 : i32 to index
    %4 = memref.load %arg3[%3] : memref<1xi32, #tpu.memory_space<smem>>
    %5 = arith.cmpi slt, %arg1, %4 : i32
    %6 = arith.extui %5 : i1 to i32
    %c0_i32_1 = arith.constant 0 : i32
    %7 = arith.cmpi ne, %6, %c0_i32_1 : i32
    scf.if %7 {
      %c0 = arith.constant 0 : index
      %c0_4 = arith.constant 0 : index
      %11 = vector.load %arg4[%c0, %c0_4] : memref<4x128xf32, #tpu.memory_space<vmem>>, vector<4x128xf32>
      %12 = vector.extract_strided_slice %11 {offsets = [0, 0], sizes = [1, 128], strides = [1, 1]} : vector<4x128xf32> to vector<1x128xf32>
      %13 = vector.extract_strided_slice %11 {offsets = [1, 0], sizes = [1, 128], strides = [1, 1]} : vector<4x128xf32> to vector<1x128xf32>
      %cst = arith.constant 0.0710466281 : f32
      %14 = vector.broadcast %cst : f32 to vector<1x128xf32>
      %15 = arith.mulf %12, %14 : vector<1x128xf32>
      %16 = arith.mulf %15, %15 : vector<1x128xf32>
      %cst_5 = arith.constant 1.53699601 : f32
      %17 = vector.broadcast %cst_5 : f32 to vector<1x128xf32>
      %18 = arith.addf %16, %17 : vector<1x128xf32>
      %19 = arith.divf %13, %18 : vector<1x128xf32>
      %20 = arith.subf %12, %19 : vector<1x128xf32>
      %cst_6 = arith.constant -0.028956918 : f32
      %21 = vector.broadcast %cst_6 : f32 to vector<1x128xf32>
      %22 = arith.mulf %20, %21 : vector<1x128xf32>
      %cst_7 = arith.constant -0.0219926517 : f32
      %23 = vector.broadcast %cst_7 : f32 to vector<1x128xf32>
      %24 = arith.mulf %12, %23 : vector<1x128xf32>
      %25 = arith.mulf %24, %24 : vector<1x128xf32>
      %cst_8 = arith.constant 0.829006671 : f32
      %26 = vector.broadcast %cst_8 : f32 to vector<1x128xf32>
      %27 = arith.subf %26, %25 : vector<1x128xf32>
      %28 = arith.mulf %13, %27 : vector<1x128xf32>
      %29 = arith.subf %12, %28 : vector<1x128xf32>
      %cst_9 = arith.constant 0.0254259259 : f32
      %30 = vector.broadcast %cst_9 : f32 to vector<1x128xf32>
      %31 = arith.mulf %29, %30 : vector<1x128xf32>
      %cst_10 = arith.constant -0.0832994058 : f32
      %32 = vector.broadcast %cst_10 : f32 to vector<1x128xf32>
      %33 = arith.mulf %12, %32 : vector<1x128xf32>
      %34 = arith.mulf %33, %33 : vector<1x128xf32>
      %35 = arith.subf %12, %34 : vector<1x128xf32>
      %cst_11 = arith.constant -0.0240021031 : f32
      %36 = vector.broadcast %cst_11 : f32 to vector<1x128xf32>
      %37 = arith.mulf %35, %36 : vector<1x128xf32>
      %cst_12 = arith.constant 0.222983792 : f32
      %38 = vector.broadcast %cst_12 : f32 to vector<1x128xf32>
      %39 = arith.subf %37, %38 : vector<1x128xf32>
      %cst_13 = arith.constant 2.62004924 : f32
      %40 = vector.broadcast %cst_13 : f32 to vector<1x128xf32>
      %41 = arith.addf %13, %40 : vector<1x128xf32>
      %cst_14 = arith.constant -0.16023761 : f32
      %42 = vector.broadcast %cst_14 : f32 to vector<1x128xf32>
      %43 = arith.mulf %12, %42 : vector<1x128xf32>
      %44 = arith.addf %41, %43 : vector<1x128xf32>
      %cst_15 = arith.constant 0.0250317939 : f32
      %45 = vector.broadcast %cst_15 : f32 to vector<1x128xf32>
      %46 = arith.mulf %44, %45 : vector<1x128xf32>
      %47 = vector.extract_strided_slice %11 {offsets = [0, 0], sizes = [1, 128], strides = [1, 1]} : vector<4x128xf32> to vector<1x128xf32>
      %cst_16 = arith.constant 0.000000e+00 : f32
      %48 = vector.broadcast %cst_16 : f32 to vector<1x128xf32>
      %49 = arith.cmpf oeq, %47, %48 : vector<1x128xf32>
      %50 = vector.extract_strided_slice %11 {offsets = [1, 0], sizes = [1, 128], strides = [1, 1]} : vector<4x128xf32> to vector<1x128xf32>
      %cst_17 = arith.constant 0.000000e+00 : f32
      %51 = vector.broadcast %cst_17 : f32 to vector<1x128xf32>
      %52 = arith.cmpf oeq, %50, %51 : vector<1x128xf32>
      %53 = arith.andi %49, %52 : vector<1x128xi1>
      %54 = vector.extract_strided_slice %11 {offsets = [2, 0], sizes = [1, 128], strides = [1, 1]} : vector<4x128xf32> to vector<1x128xf32>
      %cst_18 = arith.constant 0.000000e+00 : f32
      %55 = vector.broadcast %cst_18 : f32 to vector<1x128xf32>
      %56 = arith.cmpf oeq, %54, %55 : vector<1x128xf32>
      %57 = arith.andi %53, %56 : vector<1x128xi1>
      %58 = vector.extract_strided_slice %11 {offsets = [3, 0], sizes = [1, 128], strides = [1, 1]} : vector<4x128xf32> to vector<1x128xf32>
      %cst_19 = arith.constant 0.000000e+00 : f32
      %59 = vector.broadcast %cst_19 : f32 to vector<1x128xf32>
      %60 = arith.cmpf oeq, %58, %59 : vector<1x128xf32>
      %61 = arith.andi %57, %60 : vector<1x128xi1>
      %cst_20 = arith.constant 0.000000e+00 : f32
      %cst_21 = arith.constant 1.000000e+00 : f32
      %62 = vector.broadcast %cst_20 : f32 to vector<1x128xf32>
      %63 = vector.broadcast %cst_21 : f32 to vector<1x128xf32>
      %64 = arith.select %61, %62, %63 : vector<1x128xi1>, vector<1x128xf32>
      %65 = arith.mulf %22, %64 : vector<1x128xf32>
      %c0_22 = arith.constant 0 : index
      %c0_23 = arith.constant 0 : index
      %66 = vector.load %arg7[%c0_22, %c0_23] : memref<8x128xf32, #tpu.memory_space<vmem>>, vector<1x128xf32>
      tpu.vector_store %arg7[%c0_22, %c0_23], %65 {strides = array<i32>} : memref<8x128xf32, #tpu.memory_space<vmem>>, vector<1x128xf32>,
      %67 = arith.mulf %31, %64 : vector<1x128xf32>
      %c1 = arith.constant 1 : index
      %c0_24 = arith.constant 0 : index
      %68 = vector.load %arg7[%c1, %c0_24] : memref<8x128xf32, #tpu.memory_space<vmem>>, vector<1x128xf32>
      tpu.vector_store %arg7[%c1, %c0_24], %67 {strides = array<i32>} : memref<8x128xf32, #tpu.memory_space<vmem>>, vector<1x128xf32>,
      %69 = arith.mulf %39, %64 : vector<1x128xf32>
      %c2 = arith.constant 2 : index
      %c0_25 = arith.constant 0 : index
      %70 = vector.load %arg7[%c2, %c0_25] : memref<8x128xf32, #tpu.memory_space<vmem>>, vector<1x128xf32>
      tpu.vector_store %arg7[%c2, %c0_25], %69 {strides = array<i32>} : memref<8x128xf32, #tpu.memory_space<vmem>>, vector<1x128xf32>,
      %71 = arith.mulf %46, %64 : vector<1x128xf32>
      %c3 = arith.constant 3 : index
      %c0_26 = arith.constant 0 : index
      %72 = vector.load %arg7[%c3, %c0_26] : memref<8x128xf32, #tpu.memory_space<vmem>>, vector<1x128xf32>
      tpu.vector_store %arg7[%c3, %c0_26], %71 {strides = array<i32>} : memref<8x128xf32, #tpu.memory_space<vmem>>, vector<1x128xf32>,
      %cst_27 = arith.constant 1.000000e+00 : f32
      %73 = vector.broadcast %cst_27 : f32 to vector<1x128xf32>
      %c4 = arith.constant 4 : index
      %c0_28 = arith.constant 0 : index
      %74 = vector.load %arg7[%c4, %c0_28] : memref<8x128xf32, #tpu.memory_space<vmem>>, vector<1x128xf32>
      tpu.vector_store %arg7[%c4, %c0_28], %73 {strides = array<i32>} : memref<8x128xf32, #tpu.memory_space<vmem>>, vector<1x128xf32>,
      %cst_29 = arith.constant 0.000000e+00 : f32
      %75 = vector.broadcast %cst_29 : f32 to vector<3x128xf32>
      %c5 = arith.constant 5 : index
      %c0_30 = arith.constant 0 : index
      %76 = vector.load %arg7[%c5, %c0_30] : memref<8x128xf32, #tpu.memory_space<vmem>>, vector<3x128xf32>
      tpu.vector_store %arg7[%c5, %c0_30], %75 {strides = array<i32>} : memref<8x128xf32, #tpu.memory_space<vmem>>, vector<3x128xf32>,
      %c128_i32 = arith.constant 128 : i32
      %77 = arith.muli %arg0, %c128_i32 : i32
      %c0_31 = arith.constant 0 : index
      %c0_32 = arith.constant 0 : index
      %78 = vector.load %arg5[%c0_31, %c0_32] : memref<1x128xi32, #tpu.memory_space<vmem>>, vector<1x128xi32>
      %79 = vector.broadcast %77 : i32 to vector<1x128xi32>
      %80 = arith.subi %78, %79 : vector<1x128xi32>
      %81 = tpu.iota {dimensions = array<i32: 0>} : vector<128x128xi32>
      %82 = vector.broadcast %80 : vector<1x128xi32> to vector<128x128xi32>
      %83 = arith.cmpi eq, %81, %82 : vector<128x128xi32>
      %84 = arith.extui %83 : vector<128x128xi1> to vector<128x128xi32>
      %85 = arith.sitofp %84 : vector<128x128xi32> to vector<128x128xf32>
      %c0_33 = arith.constant 0 : index
      %c0_34 = arith.constant 0 : index
      %86 = vector.load %arg8[%c0_33, %c0_34] : memref<8x128xf32, #tpu.memory_space<vmem>>, vector<8x128xf32>
      %c0_35 = arith.constant 0 : index
      %c0_36 = arith.constant 0 : index
      %87 = vector.load %arg7[%c0_35, %c0_36] : memref<8x128xf32, #tpu.memory_space<vmem>>, vector<8x128xf32>
      %cst_37 = arith.constant dense<0.000000e+00> : vector<8x128xf32>
      %88 = tpu.matmul %87, %85, %cst_37 {dimension_numbers = #tpu.dot_dimension_numbers<[1], [1], [0], [0], [0, 0, 1, 0], [], []>, precision = #tpu.contract_precision<fp32>} : vector<8x128xf32>, vector<128x128xf32>, vector<8x128xf32> -> vector<8x128xf32>
      %89 = arith.addf %86, %88 : vector<8x128xf32>
      %c0_38 = arith.constant 0 : index
      %c0_39 = arith.constant 0 : index
      %90 = vector.load %arg8[%c0_38, %c0_39] : memref<8x128xf32, #tpu.memory_space<vmem>>, vector<8x128xf32>
      tpu.vector_store %arg8[%c0_38, %c0_39], %89 {strides = array<i32>} : memref<8x128xf32, #tpu.memory_space<vmem>>, vector<8x128xf32>,
    } else {
    }
    %c0_i32_2 = arith.constant 0 : i32
    %8 = arith.cmpi eq, %arg1, %c0_i32_2 : i32
    %9 = arith.extui %8 : i1 to i32
    %c0_i32_3 = arith.constant 0 : i32
    %10 = arith.cmpi ne, %9, %c0_i32_3 : i32
    scf.if %10 {
      %c0 = arith.constant 0 : index
      %c0_4 = arith.constant 0 : index
      %11 = vector.load %arg8[%c0, %c0_4] : memref<8x128xf32, #tpu.memory_space<vmem>>, vector<8x128xf32>
      %12 = vector.extract_strided_slice %11 {offsets = [4, 0], sizes = [1, 128], strides = [1, 1]} : vector<8x128xf32> to vector<1x128xf32>
      %cst = arith.constant 1.000000e+00 : f32
      %13 = vector.broadcast %cst : f32 to vector<1x128xf32>
      %14 = arith.maximumf %12, %13 : vector<1x128xf32>
      %cst_5 = arith.constant 1.000000e+00 : f32
      %15 = vector.broadcast %cst_5 : f32 to vector<1x128xf32>
      %16 = arith.divf %15, %14 : vector<1x128xf32>
      %17 = vector.extract_strided_slice %11 {offsets = [2, 0], sizes = [1, 128], strides = [1, 1]} : vector<8x128xf32> to vector<1x128xf32>
      %18 = vector.extract_strided_slice %11 {offsets = [3, 0], sizes = [1, 128], strides = [1, 1]} : vector<8x128xf32> to vector<1x128xf32>
      %19 = vector.extract_strided_slice %11 {offsets = [0, 0], sizes = [1, 128], strides = [1, 1]} : vector<8x128xf32> to vector<1x128xf32>
      %20 = arith.mulf %19, %16 : vector<1x128xf32>
      %21 = vector.extract_strided_slice %11 {offsets = [1, 0], sizes = [1, 128], strides = [1, 1]} : vector<8x128xf32> to vector<1x128xf32>
      %22 = arith.mulf %21, %16 : vector<1x128xf32>
      %cst_6 = arith.constant 0.159943342 : f32
      %23 = vector.broadcast %cst_6 : f32 to vector<1x128xf32>
      %24 = arith.mulf %20, %23 : vector<1x128xf32>
      %25 = arith.mulf %24, %24 : vector<1x128xf32>
      %26 = arith.addf %22, %25 : vector<1x128xf32>
      %cst_7 = arith.constant 0.586692452 : f32
      %27 = vector.broadcast %cst_7 : f32 to vector<1x128xf32>
      %28 = arith.mulf %26, %27 : vector<1x128xf32>
      %29 = arith.subf %17, %28 : vector<1x128xf32>
      %30 = arith.subf %29, %20 : vector<1x128xf32>
      %cst_8 = arith.constant 0.165964589 : f32
      %31 = vector.broadcast %cst_8 : f32 to vector<1x128xf32>
      %32 = arith.mulf %30, %31 : vector<1x128xf32>
      %cst_9 = arith.constant -0.0891758651 : f32
      %33 = vector.broadcast %cst_9 : f32 to vector<1x128xf32>
      %34 = arith.mulf %20, %33 : vector<1x128xf32>
      %35 = arith.mulf %34, %34 : vector<1x128xf32>
      %36 = arith.mulf %35, %22 : vector<1x128xf32>
      %37 = arith.subf %18, %36 : vector<1x128xf32>
      %38 = arith.subf %37, %20 : vector<1x128xf32>
      %39 = arith.addf %38, %22 : vector<1x128xf32>
      %cst_10 = arith.constant -0.0545986295 : f32
      %40 = vector.broadcast %cst_10 : f32 to vector<1x128xf32>
      %41 = arith.mulf %39, %40 : vector<1x128xf32>
      %42 = arith.addf %22, %17 : vector<1x128xf32>
      %cst_11 = arith.constant 0.0539295897 : f32
      %43 = vector.broadcast %cst_11 : f32 to vector<1x128xf32>
      %44 = arith.mulf %42, %43 : vector<1x128xf32>
      %45 = arith.mulf %20, %20 : vector<1x128xf32>
      %cst_12 = arith.constant 63.129406 : f32
      %46 = vector.broadcast %cst_12 : f32 to vector<1x128xf32>
      %47 = arith.addf %45, %46 : vector<1x128xf32>
      %cst_13 = arith.constant 12.3057737 : f32
      %48 = vector.broadcast %cst_13 : f32 to vector<1x128xf32>
      %49 = arith.divf %48, %47 : vector<1x128xf32>
      %50 = arith.mulf %20, %49 : vector<1x128xf32>
      %cst_14 = arith.constant 1.89795601 : f32
      %51 = vector.broadcast %cst_14 : f32 to vector<1x128xf32>
      %52 = arith.mulf %32, %51 : vector<1x128xf32>
      %53 = arith.addf %52, %50 : vector<1x128xf32>
      %54 = arith.subf %53, %44 : vector<1x128xf32>
      %cst_15 = arith.constant -0.185499653 : f32
      %55 = vector.broadcast %cst_15 : f32 to vector<1x128xf32>
      %56 = arith.mulf %54, %55 : vector<1x128xf32>
      %57 = arith.addf %41, %44 : vector<1x128xf32>
      %58 = arith.subf %56, %57 : vector<1x128xf32>
      %cst_16 = arith.constant 1.36445141 : f32
      %59 = vector.broadcast %cst_16 : f32 to vector<1x128xf32>
      %60 = arith.mulf %58, %59 : vector<1x128xf32>
      %cst_17 = arith.constant -0.803786098 : f32
      %61 = vector.broadcast %cst_17 : f32 to vector<1x128xf32>
      %62 = arith.mulf %32, %61 : vector<1x128xf32>
      %63 = arith.subf %62, %41 : vector<1x128xf32>
      %cst_18 = arith.constant 1.21759069 : f32
      %64 = vector.broadcast %cst_18 : f32 to vector<1x128xf32>
      %65 = arith.mulf %50, %64 : vector<1x128xf32>
      %66 = arith.addf %65, %44 : vector<1x128xf32>
      %67 = arith.addf %63, %66 : vector<1x128xf32>
      %68 = tpu.concatenate %60, %67 in 0 : vector<1x128xf32>, vector<1x128xf32> -> vector<2x128xf32>
      %c0_19 = arith.constant 0 : index
      %c0_20 = arith.constant 0 : index
      %69 = vector.load %arg6[%c0_19, %c0_20] : memref<2x128xf32, #tpu.memory_space<vmem>>, vector<2x128xf32>
      tpu.vector_store %arg6[%c0_19, %c0_20], %68 {strides = array<i32>} : memref<2x128xf32, #tpu.memory_space<vmem>>, vector<2x128xf32>,
    } else {
    }
    return
  }
  func.func @transform_0(%arg0: i32, %arg1: i32, %arg2: memref<1xi32, #tpu.memory_space<smem>>, %arg3: memref<1xi32, #tpu.memory_space<smem>>) -> (i32, i32) {
    %0 = arith.index_cast %arg0 : i32 to index
    %1 = memref.load %arg2[%0] : memref<1xi32, #tpu.memory_space<smem>>
    %2 = arith.index_cast %arg0 : i32 to index
    %3 = memref.load %arg3[%2] : memref<1xi32, #tpu.memory_space<smem>>
    %c1_i32 = arith.constant 1 : i32
    %4 = arith.subi %3, %c1_i32 : i32
    %c0_i32 = arith.constant 0 : i32
    %5 = arith.maxsi %4, %c0_i32 : i32
    %6 = arith.minsi %arg1, %5 : i32
    %7 = arith.addi %1, %6 : i32
    %c0_i32_0 = arith.constant 0 : i32
    %c0_i32_1 = arith.constant 0 : i32
    return %c0_i32_0, %7 : i32, i32
  }
  func.func @transform_1(%arg0: i32, %arg1: i32, %arg2: memref<1xi32, #tpu.memory_space<smem>>, %arg3: memref<1xi32, #tpu.memory_space<smem>>) -> (i32, i32) {
    %0 = arith.index_cast %arg0 : i32 to index
    %1 = memref.load %arg2[%0] : memref<1xi32, #tpu.memory_space<smem>>
    %2 = arith.index_cast %arg0 : i32 to index
    %3 = memref.load %arg3[%2] : memref<1xi32, #tpu.memory_space<smem>>
    %c1_i32 = arith.constant 1 : i32
    %4 = arith.subi %3, %c1_i32 : i32
    %c0_i32 = arith.constant 0 : i32
    %5 = arith.maxsi %4, %c0_i32 : i32
    %6 = arith.minsi %arg1, %5 : i32
    %7 = arith.addi %1, %6 : i32
    %c0_i32_0 = arith.constant 0 : i32
    %c0_i32_1 = arith.constant 0 : i32
    return %c0_i32_0, %7 : i32, i32
  }
  func.func @transform_2(%arg0: i32, %arg1: i32, %arg2: memref<1xi32, #tpu.memory_space<smem>>, %arg3: memref<1xi32, #tpu.memory_space<smem>>) -> (i32, i32) {
    %c0_i32 = arith.constant 0 : i32
    %c0_i32_0 = arith.constant 0 : i32
    return %c0_i32, %arg0 : i32, i32
  }
}

</mosaic_0001>

<llo_original>
// kernel: tpu_custom_call.1
$region0: #{tpu_custom_call.1}
  #allocation0 [shape = 'u32[]', space=smem, size = 0x4, offset = 0x4, fixed_abs, tag = 'smem constant byte address 0x4 - core index']
  #allocation1 [shape = 'u32[144,128]{1,0:T(1,128)}', space=vmem, size = 0x12000, scoped, tag = 'internal scratch']
  #allocation2 [shape = 'f32[8,128]{1,0:T(8,128)}', space=vmem, size = 0x1000, scoped, tag = 'scratch operand']
  #allocation3 [shape = 'f32[8,128]{1,0:T(8,128)}', space=vmem, size = 0x1000, scoped, tag = 'scratch operand']
  #allocation4 [shape = 's32[1]{0}', space=sflag, size = 0x4, scoped, tag = 'scoped memory for tpu_custom_call.1']
  #allocation5 [shape = 's32[1]{0:T(128)S(6)}', space=smem, size = 0x200, scoped, tag = 'prefetched SMEM operand 0']
  #allocation6 [shape = 's32[1]{0:T(128)S(6)}', space=smem, size = 0x200, scoped, tag = 'prefetched SMEM operand 1']
  %s0 = inlined_call_operand.<no memory space> [shape: s32[1], index: 0, kind: input, shape index: {}]
  %s1 = inlined_call_operand.<no memory space> [shape: s32[1], index: 1, kind: input, shape index: {}]
  %s2 = inlined_call_operand.vmem [shape: f32[4,128], index: 2, kind: input, shape index: {}]
  %s3 = inlined_call_operand.vmem [shape: s32[1,128], index: 3, kind: input, shape index: {}]
  %s4 = inlined_call_operand.hbm [shape: f32[2,128], index: 4, kind: output, shape index: {}]
  %s5 = sld [smem:[#allocation0]]
  $region30: #{tpu_custom_call.1} parent=0
    _
  %s7 = ssub.s32 1, %s5
  %s8 = scalar_select 0, %s7, %s5
  %9 = sst [smem:[#allocation5]] %s0
  %10 = sst [smem:[#allocation6]] %s1
  $region1: #{tpu_custom_call.1} parent=0
    #allocation7 [shape = 'u8[1024]{0}', space=vmem, size = 0x400, scoped, tag = 'output window, operand 0, single buffered']
    #allocation8 [shape = 's32[1]{0}', space=sflag, size = 0x4, scoped, tag = 'scoped memory for tpu_custom_call.1']
    %11 = vsyncpa [#allocation8], 0
    // Predicated region
    $region2: #{tpu_custom_call.1} parent=1 // pred_check
      _
    $region3: #{tpu_custom_call.1} parent=1 // pred_check_branch
      %13 = sbr.rel (0) target = $region5
    $region4: #{tpu_custom_call.1} parent=1 // pred_region
      %s14 = sld [smem:[#allocation5]]
      %s15 = sld [smem:[#allocation6]]
      %s16 = ssub.s32 %s15, 1
      %p17 = scmp.gt.s32.totalorder %s16, 0
      %s18 = scalar_select %p17, %s16, 0
      %p19 = scmp.lt.s32.totalorder 0, %s18
      %s20 = scalar_select %p19, 0, %s18
      %s21 = sadd.s32 %s14, %s20
      %p22 = scmp.lt.s32.totalorder %s21, 0
      %s23 = scalar_select %p22, %s21, 0
      %s24 = smul.addr %s23, 4
      %s25 = scalar_lea.vmem %s2, %s24
      %s26 = sld [smem:[#allocation5]]
      %s27 = sld [smem:[#allocation6]]
      %s28 = ssub.s32 %s27, 1
      %p29 = scmp.gt.s32.totalorder %s28, 0
      %s30 = scalar_select %p29, %s28, 0
      %p31 = scmp.lt.s32.totalorder 0, %s30
      %s32 = scalar_select %p31, 0, %s30
      %s33 = sadd.s32 %s26, %s32
    $region5: #{tpu_custom_call.1} parent=1 // pred_fallthru
      _
    // Predicated region
    $region6: #{tpu_custom_call.1} parent=1 // pred_check
      _
    $region7: #{tpu_custom_call.1} parent=1 // pred_check_branch
      %35 = sbr.rel (0) target = $region9
    $region8: #{tpu_custom_call.1} parent=1 // pred_region
      %s36 = sld [smem:[#allocation5]]
      %s37 = sld [smem:[#allocation6]]
      %s38 = ssub.s32 %s37, 1
      %p39 = scmp.gt.s32.totalorder %s38, 0
      %s40 = scalar_select %p39, %s38, 0
      %p41 = scmp.lt.s32.totalorder 0, %s40
      %s42 = scalar_select %p41, 0, %s40
      %s43 = sadd.s32 %s36, %s42
      %p44 = scmp.lt.s32.totalorder %s43, 0
      %s45 = scalar_select %p44, %s43, 0
      %s46 = scalar_lea.vmem %s3, %s45
      %s47 = sld [smem:[#allocation5]]
      %s48 = sld [smem:[#allocation6]]
      %s49 = ssub.s32 %s48, 1
      %p50 = scmp.gt.s32.totalorder %s49, 0
      %s51 = scalar_select %p50, %s49, 0
      %p52 = scmp.lt.s32.totalorder 0, %s51
      %s53 = scalar_select %p52, 0, %s51
      %s54 = sadd.s32 %s47, %s53
    $region9: #{tpu_custom_call.1} parent=1 // pred_fallthru
      _
    %s55 = sld [smem:[#allocation5]]
    %s56 = sld [smem:[#allocation6]]
    %s57 = ssub.s32 %s56, 1
    %p58 = scmp.gt.s32.totalorder %s57, 0
    %s59 = scalar_select %p58, %s57, 0
    %p60 = scmp.lt.s32.totalorder 0, %s59
    %s61 = scalar_select %p60, 0, %s59
    %s62 = sadd.s32 %s55, %s61
    %p63 = scmp.lt.s32.totalorder %s62, 0
    %s64 = scalar_select %p63, %s62, 0
    %s65 = smul.addr %s64, 4
    %s66 = scalar_lea.vmem %s2, %s65
    %s67 = sld [smem:[#allocation5]]
    %s68 = sld [smem:[#allocation6]]
    %s69 = ssub.s32 %s68, 1
    %p70 = scmp.gt.s32.totalorder %s69, 0
    %s71 = scalar_select %p70, %s69, 0
    %p72 = scmp.lt.s32.totalorder 0, %s71
    %s73 = scalar_select %p72, 0, %s71
    %s74 = sadd.s32 %s67, %s73
    %p75 = scmp.lt.s32.totalorder %s74, 0
    %s76 = scalar_select %p75, %s74, 0
    %s77 = scalar_lea.vmem %s3, %s76
    %s78 = sld [smem:[#allocation5]]
    %s79 = sld [smem:[#allocation6]]
    %s80 = ssub.s32 %s79, 1
    %p81 = scmp.gt.s32.totalorder %s80, 0
    %s82 = scalar_select %p81, %s80, 0
    %p83 = scmp.lt.s32.totalorder 0, %s82
    %s84 = scalar_select %p83, 0, %s82
    %s85 = sadd.s32 %s78, %s84
    %p86 = scmp.lt.s32.totalorder %s85, 0
    %s87 = scalar_select %p86, %s85, 0
    %s88 = smul.addr %s87, 4
    %s89 = scalar_lea.vmem %s2, %s88
    %s90 = sld [smem:[#allocation5]]
    %s91 = sld [smem:[#allocation6]]
    %s92 = ssub.s32 %s91, 1
    %p93 = scmp.gt.s32.totalorder %s92, 0
    %s94 = scalar_select %p93, %s92, 0
    %p95 = scmp.lt.s32.totalorder 0, %s94
    %s96 = scalar_select %p95, 0, %s94
    %s97 = sadd.s32 %s90, %s96
    %s98 = sld [smem:[#allocation5]]
    %s99 = sld [smem:[#allocation6]]
    %s100 = ssub.s32 %s99, 1
    %p101 = scmp.gt.s32.totalorder %s100, 0
    %s102 = scalar_select %p101, %s100, 0
    %p103 = scmp.lt.s32.totalorder 0, %s102
    %s104 = scalar_select %p103, 0, %s102
    %s105 = sadd.s32 %s98, %s104
    %p106 = scmp.lt.s32.totalorder %s105, 0
    %s107 = scalar_select %p106, %s105, 0
    %s108 = scalar_lea.vmem %s3, %s107
    %s109 = sld [smem:[#allocation5]]
    %s110 = sld [smem:[#allocation6]]
    %s111 = ssub.s32 %s110, 1
    %p112 = scmp.gt.s32.totalorder %s111, 0
    %s113 = scalar_select %p112, %s111, 0
    %p114 = scmp.lt.s32.totalorder 0, %s113
    %s115 = scalar_select %p114, 0, %s113
    %s116 = sadd.s32 %s109, %s115
    %p117 = scmp.eq.s32.totalorder 0, 0
    // Predicated region
    $region10: #{tpu_custom_call.1} parent=1 // pred_check
      %p118 = pneg %p117
    $region11: #{tpu_custom_call.1} parent=1 // pred_check_branch
      %120 = sbr.rel (%p118) target = $region13
    $region12: #{tpu_custom_call.1} parent=1 // pred_region
      %121 = vst [vmem:[#allocation3] sm:$0xff] 0.0
    $region13: #{tpu_custom_call.1} parent=1 // pred_fallthru
      _
    %s122 = sld [smem:[#allocation6]]
    %p123 = scmp.lt.s32.totalorder 0, %s122
    // Predicated region
    $region14: #{tpu_custom_call.1} parent=1 // pred_check
      %p124 = pneg %p123
    $region15: #{tpu_custom_call.1} parent=1 // pred_check_branch
      %126 = sbr.rel (%p124) target = $region17
    $region16: #{tpu_custom_call.1} parent=1 // pred_region
      %v127 = vld [vmem:[%s89] sm:$0xf]
      %v128 = vmul.f32 %v127, 0.07104663
      %v129 = vmul.f32 %v128, %v128
      %v130 = vadd.f32 %v129, 1.536996
      %v132 = vrot.slane %v130, 7
      %v134 = vrcp.pop %v132
      %v135 = vmul.f32 %v127, %v134
      %v137 = vrot.slane %v135, 1
      %v139 = vsub.f32 %v127, %v137
      %v140 = vmul.f32 %v139, -0.028956918
      %v141 = vmul.f32 %v127, -0.021992652
      %v142 = vmul.f32 %v141, %v141
      %v143 = vsub.f32 0.8290067, %v142
      %v145 = vrot.slane %v143, 7
      %v147 = vmul.f32 %v127, %v145
      %v149 = vrot.slane %v147, 1
      %v151 = vsub.f32 %v127, %v149
      %v152 = vmul.f32 %v151, 0.025425926
      %v153 = vmul.f32 %v127, -0.083299406
      %v154 = vmul.f32 %v153, %v153
      %v155 = vsub.f32 %v127, %v154
      %v156 = vmul.f32 %v155, -0.024002103
      %v157 = vsub.f32 %v156, 0.22298379
      %v158 = vadd.f32 %v127, 2.6200492
      %v159 = vmul.f32 %v127, -0.16023761
      %v161 = vrot.slane %v159, 7
      %v163 = vadd.f32 %v158, %v161
      %v164 = vmul.f32 %v163, 0.025031794
      %vm165 = vcmp.eq.f32.partialorder %v127, 0.0
      %v166 = vsel %vm165, 1, 0
      %v167 = vrot.slane %v166, 1
      %vm168 = vcmp.ne.s32.totalorder %v167, 0
      %vm169 = vmand %vm165, %vm168
      %v170 = vrot.slane %v166, 2
      %vm171 = vcmp.ne.s32.totalorder %v170, 0
      %vm172 = vmand %vm169, %vm171
      %v173 = vrot.slane %v166, 3
      %vm174 = vcmp.ne.s32.totalorder %v173, 0
      %vm175 = vmand %vm172, %vm174
      %v176 = vsel %vm175, 0.0, 1.0
      %v177 = vmul.f32 %v140, %v176
      %178 = vst [vmem:[#allocation2] sm:$0x1] %v177
      %v179 = vmul.f32 %v152, %v176
      %180 = vst [vmem:[#allocation2 + $0x1] sm:$0x1] %v179
      %v181 = vmul.f32 %v157, %v176
      %182 = vst [vmem:[#allocation2 + $0x2] sm:$0x1] %v181
      %v184 = vrot.slane %v176, 7
      %v186 = vmul.f32 %v164, %v184
      %187 = vst [vmem:[#allocation2 + $0x2] sm:$0x2] %v186
      %188 = vst [vmem:[#allocation2 + $0x4] sm:$0x1] 1.0
      %189 = vst [vmem:[#allocation2 + $0x5] sm:$0x7] 0.0
      %s190 = smul.u32 0, 128
      %v191 = vld [vmem:[%s108] sm:$0x1]
      %v192 = vstv %s190
      %v193 = vsub.s32 %v191, %v192
      %v194 = vlaneseq
      %v195 = vshrl.u32 %v194, 7
      %v196 = vadd.s32 %v195, 8
      %v197 = vadd.s32 %v195, 16
      %v198 = vadd.s32 %v195, 24
      %v199 = vadd.s32 %v195, 32
      %v200 = vadd.s32 %v195, 40
      %v201 = vadd.s32 %v195, 48
      %v202 = vadd.s32 %v195, 56
      %v203 = vadd.s32 %v195, 64
      %v204 = vadd.s32 %v195, 72
      %v205 = vadd.s32 %v195, 80
      %v206 = vadd.s32 %v195, 88
      %v207 = vadd.s32 %v195, 96
      %v208 = vadd.s32 %v195, 104
      %v209 = vadd.s32 %v195, 112
      %v210 = vadd.s32 %v195, 120
      %v211 = vlaneseq
      %v212 = vshrl.u32 %v211, 7
      %v213 = vsub.s32 0, %v212
      %v214 = vrot.slane %v193, %v213
      %vm215 = vcmp.eq.s32.totalorder %v195, %v214
      %vm216 = vcmp.eq.s32.totalorder %v196, %v214
      %vm217 = vcmp.eq.s32.totalorder %v197, %v214
      %vm218 = vcmp.eq.s32.totalorder %v198, %v214
      %vm219 = vcmp.eq.s32.totalorder %v199, %v214
      %vm220 = vcmp.eq.s32.totalorder %v200, %v214
      %vm221 = vcmp.eq.s32.totalorder %v201, %v214
      %vm222 = vcmp.eq.s32.totalorder %v202, %v214
      %vm223 = vcmp.eq.s32.totalorder %v203, %v214
      %vm224 = vcmp.eq.s32.totalorder %v204, %v214
      %vm225 = vcmp.eq.s32.totalorder %v205, %v214
      %vm226 = vcmp.eq.s32.totalorder %v206, %v214
      %vm227 = vcmp.eq.s32.totalorder %v207, %v214
      %vm228 = vcmp.eq.s32.totalorder %v208, %v214
      %vm229 = vcmp.eq.s32.totalorder %v209, %v214
      %vm230 = vcmp.eq.s32.totalorder %v210, %v214
      %v231 = vsel %vm215, 1, 0
      %v232 = vsel %vm216, 1, 0
      %v233 = vsel %vm217, 1, 0
      %v234 = vsel %vm218, 1, 0
      %v235 = vsel %vm219, 1, 0
      %v236 = vsel %vm220, 1, 0
      %v237 = vsel %vm221, 1, 0
      %v238 = vsel %vm222, 1, 0
      %v239 = vsel %vm223, 1, 0
      %v240 = vsel %vm224, 1, 0
      %v241 = vsel %vm225, 1, 0
      %v242 = vsel %vm226, 1, 0
      %v243 = vsel %vm227, 1, 0
      %v244 = vsel %vm228, 1, 0
      %v245 = vsel %vm229, 1, 0
      %v246 = vsel %vm230, 1, 0
      %v247 = vcvt.s32.f32 %v231
      %v248 = vcvt.s32.f32 %v232
      %v249 = vcvt.s32.f32 %v233
      %v250 = vcvt.s32.f32 %v234
      %v251 = vcvt.s32.f32 %v235
      %v252 = vcvt.s32.f32 %v236
      %v253 = vcvt.s32.f32 %v237
      %v254 = vcvt.s32.f32 %v238
      %v255 = vcvt.s32.f32 %v239
      %v256 = vcvt.s32.f32 %v240
      %v257 = vcvt.s32.f32 %v241
      %v258 = vcvt.s32.f32 %v242
      %v259 = vcvt.s32.f32 %v243
      %v260 = vcvt.s32.f32 %v244
      %v261 = vcvt.s32.f32 %v245
      %v262 = vcvt.s32.f32 %v246
      %v263 = vld [vmem:[#allocation3] sm:$0xff]
      %v264 = vld [vmem:[#allocation2] sm:$0xff]
      %265 = vmatprep.subr.mxu0 0.0
      %v266 = vand.u32 %v262, 4294901760
      %267 = vmatpush1.xpose.msra.mxu0 %v266
      %268 = vmatprep.subr.mxu0 0.0
      %v269 = vand.u32 %v261, 4294901760
      %270 = vmatpush1.xpose.msra.mxu0 %v269
      %271 = vmatprep.subr.mxu0 0.0
      %v272 = vand.u32 %v260, 4294901760
      %273 = vmatpush1.xpose.msra.mxu0 %v272
      %274 = vmatprep.subr.mxu0 0.0
      %v275 = vand.u32 %v259, 4294901760
      %276 = vmatpush1.xpose.msra.mxu0 %v275
      %277 = vmatprep.subr.mxu0 0.0
      %v278 = vand.u32 %v258, 4294901760
      %279 = vmatpush1.xpose.msra.mxu0 %v278
      %280 = vmatprep.subr.mxu0 0.0
      %v281 = vand.u32 %v257, 4294901760
      %282 = vmatpush1.xpose.msra.mxu0 %v281
      %283 = vmatprep.subr.mxu0 0.0
      %v284 = vand.u32 %v256, 4294901760
      %285 = vmatpush1.xpose.msra.mxu0 %v284
      %286 = vmatprep.subr.mxu0 0.0
      %v287 = vand.u32 %v255, 4294901760
      %288 = vmatpush1.xpose.msra.mxu0 %v287
      %289 = vmatprep.subr.mxu0 0.0
      %v290 = vand.u32 %v254, 4294901760
      %291 = vmatpush1.xpose.msra.mxu0 %v290
      %292 = vmatprep.subr.mxu0 0.0
      %v293 = vand.u32 %v253, 4294901760
      %294 = vmatpush1.xpose.msra.mxu0 %v293
      %295 = vmatprep.subr.mxu0 0.0
      %v296 = vand.u32 %v252, 4294901760
      %297 = vmatpush1.xpose.msra.mxu0 %v296
      %298 = vmatprep.subr.mxu0 0.0
      %v299 = vand.u32 %v251, 4294901760
      %300 = vmatpush1.xpose.msra.mxu0 %v299
      %301 = vmatprep.subr.mxu0 0.0
      %v302 = vand.u32 %v250, 4294901760
      %303 = vmatpush1.xpose.msra.mxu0 %v302
      %304 = vmatprep.subr.mxu0 0.0
      %v305 = vand.u32 %v249, 4294901760
      %306 = vmatpush1.xpose.msra.mxu0 %v305
      %307 = vmatprep.subr.mxu0 0.0
      %v308 = vand.u32 %v248, 4294901760
      %309 = vmatpush1.xpose.msra.mxu0 %v308
      %310 = vmatprep.subr.mxu0 0.0
      %v311 = vand.u32 %v247, 4294901760
      %312 = vmatpush1.xpose.msra.mxu0 %v311
      %313 = vmatprep.subr.mxu0 0.0
      %314 = vmatpush2.xpose.msra.mxu0 0.0
      %315 = vmatprep.subr.mxu0 0.0
      %316 = vmatpush2.xpose.msra.mxu0 0.0
      %317 = vmatprep.subr.mxu0 0.0
      %318 = vmatpush2.xpose.msra.mxu0 0.0
      %319 = vmatprep.subr.mxu0 0.0
      %320 = vmatpush2.xpose.msra.mxu0 0.0
      %321 = vmatprep.subr.mxu0 0.0
      %322 = vmatpush2.xpose.msra.mxu0 0.0
      %323 = vmatprep.subr.mxu0 0.0
      %324 = vmatpush2.xpose.msra.mxu0 0.0
      %325 = vmatprep.subr.mxu0 0.0
      %326 = vmatpush2.xpose.msra.mxu0 0.0
      %327 = vmatprep.subr.mxu0 0.0
      %328 = vmatpush2.xpose.msra.mxu0 0.0
      %329 = vmatprep.subr.mxu0 0.0
      %330 = vmatpush2.xpose.msra.mxu0 0.0
      %331 = vmatprep.subr.mxu0 0.0
      %332 = vmatpush2.xpose.msra.mxu0 0.0
      %333 = vmatprep.subr.mxu0 0.0
      %334 = vmatpush2.xpose.msra.mxu0 0.0
      %335 = vmatprep.subr.mxu0 0.0
      %336 = vmatpush2.xpose.msra.mxu0 0.0
      %337 = vmatprep.subr.mxu0 0.0
      %338 = vmatpush2.xpose.msra.mxu0 0.0
      %339 = vmatprep.subr.mxu0 0.0
      %340 = vmatpush2.xpose.msra.mxu0 0.0
      %341 = vmatprep.subr.mxu0 0.0
      %342 = vmatpush2.xpose.msra.mxu0 0.0
      %343 = vmatprep.subr.mxu0 0.0
      %344 = vmatpush2.xpose.msra.mxu0 0.0
      %345 = vmatprep.mubr.f32.mxu0 0.0
      %v346 = vand.u32 %v264, 4294901760
      %v347 = vsub.f32 %v264, %v346
      %v348 = vand.u32 %v347, 4294901760
      %v349 = vsub.f32 %v347, %v348
      %v350 = vand.u32 %v349, 4294901760
      %351 = vmatmul.mubr.f32.gmra.mxu0 %v350
      %v352 = vpop.f32.mrf.mxu0
      %v353 = vadd.f32 0.0, %v352
      %v354 = vpop.f32.mrf.mxu0
      %355 = vdwg.mxu0
      %356 = vmatprep.subr.mxu0 0.0
      %v357 = vand.u32 %v262, 4294901760
      %v358 = vsub.f32 %v262, %v357
      %v359 = vand.u32 %v358, 4294901760
      %v360 = vsub.f32 %v358, %v359
      %v361 = vand.u32 %v360, 4294901760
      %362 = vmatpush1.xpose.msra.mxu0 %v361
      %363 = vmatprep.subr.mxu0 0.0
      %v364 = vand.u32 %v261, 4294901760
      %v365 = vsub.f32 %v261, %v364
      %v366 = vand.u32 %v365, 4294901760
      %v367 = vsub.f32 %v365, %v366
      %v368 = vand.u32 %v367, 4294901760
      %369 = vmatpush1.xpose.msra.mxu0 %v368
      %370 = vmatprep.subr.mxu0 0.0
      %v371 = vand.u32 %v260, 4294901760
      %v372 = vsub.f32 %v260, %v371
      %v373 = vand.u32 %v372, 4294901760
      %v374 = vsub.f32 %v372, %v373
      %v375 = vand.u32 %v374, 4294901760
      %376 = vmatpush1.xpose.msra.mxu0 %v375
      %377 = vmatprep.subr.mxu0 0.0
      %v378 = vand.u32 %v259, 4294901760
      %v379 = vsub.f32 %v259, %v378
      %v380 = vand.u32 %v379, 4294901760
      %v381 = vsub.f32 %v379, %v380
      %v382 = vand.u32 %v381, 4294901760
      %383 = vmatpush1.xpose.msra.mxu0 %v382
      %384 = vmatprep.subr.mxu0 0.0
      %v385 = vand.u32 %v258, 4294901760
      %v386 = vsub.f32 %v258, %v385
      %v387 = vand.u32 %v386, 4294901760
      %v388 = vsub.f32 %v386, %v387
      %v389 = vand.u32 %v388, 4294901760
      %390 = vmatpush1.xpose.msra.mxu0 %v389
      %391 = vmatprep.subr.mxu0 0.0
      %v392 = vand.u32 %v257, 4294901760
      %v393 = vsub.f32 %v257, %v392
      %v394 = vand.u32 %v393, 4294901760
      %v395 = vsub.f32 %v393, %v394
      %v396 = vand.u32 %v395, 4294901760
      %397 = vmatpush1.xpose.msra.mxu0 %v396
      %398 = vmatprep.subr.mxu0 0.0
      %v399 = vand.u32 %v256, 4294901760
      %v400 = vsub.f32 %v256, %v399
      %v401 = vand.u32 %v400, 4294901760
      %v402 = vsub.f32 %v400, %v401
      %v403 = vand.u32 %v402, 4294901760
      %404 = vmatpush1.xpose.msra.mxu0 %v403
      %405 = vmatprep.subr.mxu0 0.0
      %v406 = vand.u32 %v255, 4294901760
      %v407 = vsub.f32 %v255, %v406
      %v408 = vand.u32 %v407, 4294901760
      %v409 = vsub.f32 %v407, %v408
      %v410 = vand.u32 %v409, 4294901760
      %411 = vmatpush1.xpose.msra.mxu0 %v410
      %412 = vmatprep.subr.mxu0 0.0
      %v413 = vand.u32 %v254, 4294901760
      %v414 = vsub.f32 %v254, %v413
      %v415 = vand.u32 %v414, 4294901760
      %v416 = vsub.f32 %v414, %v415
      %v417 = vand.u32 %v416, 4294901760
      %418 = vmatpush1.xpose.msra.mxu0 %v417
      %419 = vmatprep.subr.mxu0 0.0
      %v420 = vand.u32 %v253, 4294901760
      %v421 = vsub.f32 %v253, %v420
      %v422 = vand.u32 %v421, 4294901760
      %v423 = vsub.f32 %v421, %v422
      %v424 = vand.u32 %v423, 4294901760
      %425 = vmatpush1.xpose.msra.mxu0 %v424
      %426 = vmatprep.subr.mxu0 0.0
      %v427 = vand.u32 %v252, 4294901760
      %v428 = vsub.f32 %v252, %v427
      %v429 = vand.u32 %v428, 4294901760
      %v430 = vsub.f32 %v428, %v429
      %v431 = vand.u32 %v430, 4294901760
      %432 = vmatpush1.xpose.msra.mxu0 %v431
      %433 = vmatprep.subr.mxu0 0.0
      %v434 = vand.u32 %v251, 4294901760
      %v435 = vsub.f32 %v251, %v434
      %v436 = vand.u32 %v435, 4294901760
      %v437 = vsub.f32 %v435, %v436
      %v438 = vand.u32 %v437, 4294901760
      %439 = vmatpush1.xpose.msra.mxu0 %v438
      %440 = vmatprep.subr.mxu0 0.0
      %v441 = vand.u32 %v250, 4294901760
      %v442 = vsub.f32 %v250, %v441
      %v443 = vand.u32 %v442, 4294901760
      %v444 = vsub.f32 %v442, %v443
      %v445 = vand.u32 %v444, 4294901760
      %446 = vmatpush1.xpose.msra.mxu0 %v445
      %447 = vmatprep.subr.mxu0 0.0
      %v448 = vand.u32 %v249, 4294901760
      %v449 = vsub.f32 %v249, %v448
      %v450 = vand.u32 %v449, 4294901760
      %v451 = vsub.f32 %v449, %v450
      %v452 = vand.u32 %v451, 4294901760
      %453 = vmatpush1.xpose.msra.mxu0 %v452
      %454 = vmatprep.subr.mxu0 0.0
      %v455 = vand.u32 %v248, 4294901760
      %v456 = vsub.f32 %v248, %v455
      %v457 = vand.u32 %v456, 4294901760
      %v458 = vsub.f32 %v456, %v457
      %v459 = vand.u32 %v458, 4294901760
      %460 = vmatpush1.xpose.msra.mxu0 %v459
      %461 = vmatprep.subr.mxu0 0.0
      %v462 = vand.u32 %v247, 4294901760
      %v463 = vsub.f32 %v247, %v462
      %v464 = vand.u32 %v463, 4294901760
      %v465 = vsub.f32 %v463, %v464
      %v466 = vand.u32 %v465, 4294901760
      %467 = vmatpush1.xpose.msra.mxu0 %v466
      %468 = vmatprep.subr.mxu0 0.0
      %469 = vmatpush2.xpose.msra.mxu0 0.0
      %470 = vmatprep.subr.mxu0 0.0
      %471 = vmatpush2.xpose.msra.mxu0 0.0
      %472 = vmatprep.subr.mxu0 0.0
      %473 = vmatpush2.xpose.msra.mxu0 0.0
      %474 = vmatprep.subr.mxu0 0.0
      %475 = vmatpush2.xpose.msra.mxu0 0.0
      %476 = vmatprep.subr.mxu0 0.0
      %477 = vmatpush2.xpose.msra.mxu0 0.0
      %478 = vmatprep.subr.mxu0 0.0
      %479 = vmatpush2.xpose.msra.mxu0 0.0
      %480 = vmatprep.subr.mxu0 0.0
      %481 = vmatpush2.xpose.msra.mxu0 0.0
      %482 = vmatprep.subr.mxu0 0.0
      %483 = vmatpush2.xpose.msra.mxu0 0.0
      %484 = vmatprep.subr.mxu0 0.0
      %485 = vmatpush2.xpose.msra.mxu0 0.0
      %486 = vmatprep.subr.mxu0 0.0
      %487 = vmatpush2.xpose.msra.mxu0 0.0
      %488 = vmatprep.subr.mxu0 0.0
      %489 = vmatpush2.xpose.msra.mxu0 0.0
      %490 = vmatprep.subr.mxu0 0.0
      %491 = vmatpush2.xpose.msra.mxu0 0.0
      %492 = vmatprep.subr.mxu0 0.0
      %493 = vmatpush2.xpose.msra.mxu0 0.0
      %494 = vmatprep.subr.mxu0 0.0
      %495 = vmatpush2.xpose.msra.mxu0 0.0
      %496 = vmatprep.subr.mxu0 0.0
      %497 = vmatpush2.xpose.msra.mxu0 0.0
      %498 = vmatprep.subr.mxu0 0.0
      %499 = vmatpush2.xpose.msra.mxu0 0.0
      %500 = vmatprep.mubr.f32.mxu0 0.0
      %v501 = vand.u32 %v264, 4294901760
      %502 = vmatmul.mubr.f32.gmra.mxu0 %v501
      %v503 = vpop.f32.mrf.mxu0
      %v504 = vadd.f32 %v353, %v503
      %v505 = vpop.f32.mrf.mxu0
      %506 = vdwg.mxu0
      %507 = vmatprep.subr.mxu0 0.0
      %v508 = vand.u32 %v262, 4294901760
      %v509 = vsub.f32 %v262, %v508
      %510 = vmatpush1.xpose.msra.mxu0 %v509
      %511 = vmatprep.subr.mxu0 0.0
      %v512 = vand.u32 %v261, 4294901760
      %v513 = vsub.f32 %v261, %v512
      %514 = vmatpush1.xpose.msra.mxu0 %v513
      %515 = vmatprep.subr.mxu0 0.0
      %v516 = vand.u32 %v260, 4294901760
      %v517 = vsub.f32 %v260, %v516
      %518 = vmatpush1.xpose.msra.mxu0 %v517
      %519 = vmatprep.subr.mxu0 0.0
      %v520 = vand.u32 %v259, 4294901760
      %v521 = vsub.f32 %v259, %v520
      %522 = vmatpush1.xpose.msra.mxu0 %v521
      %523 = vmatprep.subr.mxu0 0.0
      %v524 = vand.u32 %v258, 4294901760
      %v525 = vsub.f32 %v258, %v524
      %526 = vmatpush1.xpose.msra.mxu0 %v525
      %527 = vmatprep.subr.mxu0 0.0
      %v528 = vand.u32 %v257, 4294901760
      %v529 = vsub.f32 %v257, %v528
      %530 = vmatpush1.xpose.msra.mxu0 %v529
      %531 = vmatprep.subr.mxu0 0.0
      %v532 = vand.u32 %v256, 4294901760
      %v533 = vsub.f32 %v256, %v532
      %534 = vmatpush1.xpose.msra.mxu0 %v533
      %535 = vmatprep.subr.mxu0 0.0
      %v536 = vand.u32 %v255, 4294901760
      %v537 = vsub.f32 %v255, %v536
      %538 = vmatpush1.xpose.msra.mxu0 %v537
      %539 = vmatprep.subr.mxu0 0.0
      %v540 = vand.u32 %v254, 4294901760
      %v541 = vsub.f32 %v254, %v540
      %542 = vmatpush1.xpose.msra.mxu0 %v541
      %543 = vmatprep.subr.mxu0 0.0
      %v544 = vand.u32 %v253, 4294901760
      %v545 = vsub.f32 %v253, %v544
      %546 = vmatpush1.xpose.msra.mxu0 %v545
      %547 = vmatprep.subr.mxu0 0.0
      %v548 = vand.u32 %v252, 4294901760
      %v549 = vsub.f32 %v252, %v548
      %550 = vmatpush1.xpose.msra.mxu0 %v549
      %551 = vmatprep.subr.mxu0 0.0
      %v552 = vand.u32 %v251, 4294901760
      %v553 = vsub.f32 %v251, %v552
      %554 = vmatpush1.xpose.msra.mxu0 %v553
      %555 = vmatprep.subr.mxu0 0.0
      %v556 = vand.u32 %v250, 4294901760
      %v557 = vsub.f32 %v250, %v556
      %558 = vmatpush1.xpose.msra.mxu0 %v557
      %559 = vmatprep.subr.mxu0 0.0
      %v560 = vand.u32 %v249, 4294901760
      %v561 = vsub.f32 %v249, %v560
      %562 = vmatpush1.xpose.msra.mxu0 %v561
      %563 = vmatprep.subr.mxu0 0.0
      %v564 = vand.u32 %v248, 4294901760
      %v565 = vsub.f32 %v248, %v564
      %566 = vmatpush1.xpose.msra.mxu0 %v565
      %567 = vmatprep.subr.mxu0 0.0
      %v568 = vand.u32 %v247, 4294901760
      %v569 = vsub.f32 %v247, %v568
      %570 = vmatpush1.xpose.msra.mxu0 %v569
      %571 = vmatprep.subr.mxu0 0.0
      %572 = vmatpush2.xpose.msra.mxu0 0.0
      %573 = vmatprep.subr.mxu0 0.0
      %574 = vmatpush2.xpose.msra.mxu0 0.0
      %575 = vmatprep.subr.mxu0 0.0
      %576 = vmatpush2.xpose.msra.mxu0 0.0
      %577 = vmatprep.subr.mxu0 0.0
      %578 = vmatpush2.xpose.msra.mxu0 0.0
      %579 = vmatprep.subr.mxu0 0.0
      %580 = vmatpush2.xpose.msra.mxu0 0.0
      %581 = vmatprep.subr.mxu0 0.0
      %582 = vmatpush2.xpose.msra.mxu0 0.0
      %583 = vmatprep.subr.mxu0 0.0
      %584 = vmatpush2.xpose.msra.mxu0 0.0
      %585 = vmatprep.subr.mxu0 0.0
      %586 = vmatpush2.xpose.msra.mxu0 0.0
      %587 = vmatprep.subr.mxu0 0.0
      %588 = vmatpush2.xpose.msra.mxu0 0.0
      %589 = vmatprep.subr.mxu0 0.0
      %590 = vmatpush2.xpose.msra.mxu0 0.0
      %591 = vmatprep.subr.mxu0 0.0
      %592 = vmatpush2.xpose.msra.mxu0 0.0
      %593 = vmatprep.subr.mxu0 0.0
      %594 = vmatpush2.xpose.msra.mxu0 0.0
      %595 = vmatprep.subr.mxu0 0.0
      %596 = vmatpush2.xpose.msra.mxu0 0.0
      %597 = vmatprep.subr.mxu0 0.0
      %598 = vmatpush2.xpose.msra.mxu0 0.0
      %599 = vmatprep.subr.mxu0 0.0
      %600 = vmatpush2.xpose.msra.mxu0 0.0
      %601 = vmatprep.subr.mxu0 0.0
      %602 = vmatpush2.xpose.msra.mxu0 0.0
      %603 = vmatprep.mubr.f32.mxu0 0.0
      %v604 = vand.u32 %v264, 4294901760
      %v605 = vsub.f32 %v264, %v604
      %606 = vmatmul.mubr.f32.gmra.mxu0 %v605
      %v607 = vpop.f32.mrf.mxu0
      %v608 = vadd.f32 %v504, %v607
      %v609 = vpop.f32.mrf.mxu0
      %610 = vdwg.mxu0
      %611 = vmatprep.subr.mxu0 0.0
      %v612 = vand.u32 %v262, 4294901760
      %613 = vmatpush1.xpose.msra.mxu0 %v612
      %614 = vmatprep.subr.mxu0 0.0
      %v615 = vand.u32 %v261, 4294901760
      %616 = vmatpush1.xpose.msra.mxu0 %v615
      %617 = vmatprep.subr.mxu0 0.0
      %v618 = vand.u32 %v260, 4294901760
      %619 = vmatpush1.xpose.msra.mxu0 %v618
      %620 = vmatprep.subr.mxu0 0.0
      %v621 = vand.u32 %v259, 4294901760
      %622 = vmatpush1.xpose.msra.mxu0 %v621
      %623 = vmatprep.subr.mxu0 0.0
      %v624 = vand.u32 %v258, 4294901760
      %625 = vmatpush1.xpose.msra.mxu0 %v624
      %626 = vmatprep.subr.mxu0 0.0
      %v627 = vand.u32 %v257, 4294901760
      %628 = vmatpush1.xpose.msra.mxu0 %v627
      %629 = vmatprep.subr.mxu0 0.0
      %v630 = vand.u32 %v256, 4294901760
      %631 = vmatpush1.xpose.msra.mxu0 %v630
      %632 = vmatprep.subr.mxu0 0.0
      %v633 = vand.u32 %v255, 4294901760
      %634 = vmatpush1.xpose.msra.mxu0 %v633
      %635 = vmatprep.subr.mxu0 0.0
      %v636 = vand.u32 %v254, 4294901760
      %637 = vmatpush1.xpose.msra.mxu0 %v636
      %638 = vmatprep.subr.mxu0 0.0
      %v639 = vand.u32 %v253, 4294901760
      %640 = vmatpush1.xpose.msra.mxu0 %v639
      %641 = vmatprep.subr.mxu0 0.0
      %v642 = vand.u32 %v252, 4294901760
      %643 = vmatpush1.xpose.msra.mxu0 %v642
      %644 = vmatprep.subr.mxu0 0.0
      %v645 = vand.u32 %v251, 4294901760
      %646 = vmatpush1.xpose.msra.mxu0 %v645
      %647 = vmatprep.subr.mxu0 0.0
      %v648 = vand.u32 %v250, 4294901760
      %649 = vmatpush1.xpose.msra.mxu0 %v648
      %650 = vmatprep.subr.mxu0 0.0
      %v651 = vand.u32 %v249, 4294901760
      %652 = vmatpush1.xpose.msra.mxu0 %v651
      %653 = vmatprep.subr.mxu0 0.0
      %v654 = vand.u32 %v248, 4294901760
      %655 = vmatpush1.xpose.msra.mxu0 %v654
      %656 = vmatprep.subr.mxu0 0.0
      %v657 = vand.u32 %v247, 4294901760
      %658 = vmatpush1.xpose.msra.mxu0 %v657
      %659 = vmatprep.subr.mxu0 0.0
      %660 = vmatpush2.xpose.msra.mxu0 0.0
      %661 = vmatprep.subr.mxu0 0.0
      %662 = vmatpush2.xpose.msra.mxu0 0.0
      %663 = vmatprep.subr.mxu0 0.0
      %664 = vmatpush2.xpose.msra.mxu0 0.0
      %665 = vmatprep.subr.mxu0 0.0
      %666 = vmatpush2.xpose.msra.mxu0 0.0
      %667 = vmatprep.subr.mxu0 0.0
      %668 = vmatpush2.xpose.msra.mxu0 0.0
      %669 = vmatprep.subr.mxu0 0.0
      %670 = vmatpush2.xpose.msra.mxu0 0.0
      %671 = vmatprep.subr.mxu0 0.0
      %672 = vmatpush2.xpose.msra.mxu0 0.0
      %673 = vmatprep.subr.mxu0 0.0
      %674 = vmatpush2.xpose.msra.mxu0 0.0
      %675 = vmatprep.subr.mxu0 0.0
      %676 = vmatpush2.xpose.msra.mxu0 0.0
      %677 = vmatprep.subr.mxu0 0.0
      %678 = vmatpush2.xpose.msra.mxu0 0.0
      %679 = vmatprep.subr.mxu0 0.0
      %680 = vmatpush2.xpose.msra.mxu0 0.0
      %681 = vmatprep.subr.mxu0 0.0
      %682 = vmatpush2.xpose.msra.mxu0 0.0
      %683 = vmatprep.subr.mxu0 0.0
      %684 = vmatpush2.xpose.msra.mxu0 0.0
      %685 = vmatprep.subr.mxu0 0.0
      %686 = vmatpush2.xpose.msra.mxu0 0.0
      %687 = vmatprep.subr.mxu0 0.0
      %688 = vmatpush2.xpose.msra.mxu0 0.0
      %689 = vmatprep.subr.mxu0 0.0
      %690 = vmatpush2.xpose.msra.mxu0 0.0
      %691 = vmatprep.mubr.f32.mxu0 0.0
      %v692 = vand.u32 %v264, 4294901760
      %v693 = vsub.f32 %v264, %v692
      %v694 = vand.u32 %v693, 4294901760
      %695 = vmatmul.mubr.f32.gmra.mxu0 %v694
      %v696 = vpop.f32.mrf.mxu0
      %v697 = vadd.f32 %v608, %v696
      %v698 = vpop.f32.mrf.mxu0
      %699 = vdwg.mxu0
      %700 = vmatprep.subr.mxu0 0.0
      %v701 = vand.u32 %v262, 4294901760
      %v702 = vsub.f32 %v262, %v701
      %v703 = vand.u32 %v702, 4294901760
      %704 = vmatpush1.xpose.msra.mxu0 %v703
      %705 = vmatprep.subr.mxu0 0.0
      %v706 = vand.u32 %v261, 4294901760
      %v707 = vsub.f32 %v261, %v706
      %v708 = vand.u32 %v707, 4294901760
      %709 = vmatpush1.xpose.msra.mxu0 %v708
      %710 = vmatprep.subr.mxu0 0.0
      %v711 = vand.u32 %v260, 4294901760
      %v712 = vsub.f32 %v260, %v711
      %v713 = vand.u32 %v712, 4294901760
      %714 = vmatpush1.xpose.msra.mxu0 %v713
      %715 = vmatprep.subr.mxu0 0.0
      %v716 = vand.u32 %v259, 4294901760
      %v717 = vsub.f32 %v259, %v716
      %v718 = vand.u32 %v717, 4294901760
      %719 = vmatpush1.xpose.msra.mxu0 %v718
      %720 = vmatprep.subr.mxu0 0.0
      %v721 = vand.u32 %v258, 4294901760
      %v722 = vsub.f32 %v258, %v721
      %v723 = vand.u32 %v722, 4294901760
      %724 = vmatpush1.xpose.msra.mxu0 %v723
      %725 = vmatprep.subr.mxu0 0.0
      %v726 = vand.u32 %v257, 4294901760
      %v727 = vsub.f32 %v257, %v726
      %v728 = vand.u32 %v727, 4294901760
      %729 = vmatpush1.xpose.msra.mxu0 %v728
      %730 = vmatprep.subr.mxu0 0.0
      %v731 = vand.u32 %v256, 4294901760
      %v732 = vsub.f32 %v256, %v731
      %v733 = vand.u32 %v732, 4294901760
      %734 = vmatpush1.xpose.msra.mxu0 %v733
      %735 = vmatprep.subr.mxu0 0.0
      %v736 = vand.u32 %v255, 4294901760
      %v737 = vsub.f32 %v255, %v736
      %v738 = vand.u32 %v737, 4294901760
      %739 = vmatpush1.xpose.msra.mxu0 %v738
      %740 = vmatprep.subr.mxu0 0.0
      %v741 = vand.u32 %v254, 4294901760
      %v742 = vsub.f32 %v254, %v741
      %v743 = vand.u32 %v742, 4294901760
      %744 = vmatpush1.xpose.msra.mxu0 %v743
      %745 = vmatprep.subr.mxu0 0.0
      %v746 = vand.u32 %v253, 4294901760
      %v747 = vsub.f32 %v253, %v746
      %v748 = vand.u32 %v747, 4294901760
      %749 = vmatpush1.xpose.msra.mxu0 %v748
      %750 = vmatprep.subr.mxu0 0.0
      %v751 = vand.u32 %v252, 4294901760
      %v752 = vsub.f32 %v252, %v751
      %v753 = vand.u32 %v752, 4294901760
      %754 = vmatpush1.xpose.msra.mxu0 %v753
      %755 = vmatprep.subr.mxu0 0.0
      %v756 = vand.u32 %v251, 4294901760
      %v757 = vsub.f32 %v251, %v756
      %v758 = vand.u32 %v757, 4294901760
      %759 = vmatpush1.xpose.msra.mxu0 %v758
      %760 = vmatprep.subr.mxu0 0.0
      %v761 = vand.u32 %v250, 4294901760
      %v762 = vsub.f32 %v250, %v761
      %v763 = vand.u32 %v762, 4294901760
      %764 = vmatpush1.xpose.msra.mxu0 %v763
      %765 = vmatprep.subr.mxu0 0.0
      %v766 = vand.u32 %v249, 4294901760
      %v767 = vsub.f32 %v249, %v766
      %v768 = vand.u32 %v767, 4294901760
      %769 = vmatpush1.xpose.msra.mxu0 %v768
      %770 = vmatprep.subr.mxu0 0.0
      %v771 = vand.u32 %v248, 4294901760
      %v772 = vsub.f32 %v248, %v771
      %v773 = vand.u32 %v772, 4294901760
      %774 = vmatpush1.xpose.msra.mxu0 %v773
      %775 = vmatprep.subr.mxu0 0.0
      %v776 = vand.u32 %v247, 4294901760
      %v777 = vsub.f32 %v247, %v776
      %v778 = vand.u32 %v777, 4294901760
      %779 = vmatpush1.xpose.msra.mxu0 %v778
      %780 = vmatprep.subr.mxu0 0.0
      %781 = vmatpush2.xpose.msra.mxu0 0.0
      %782 = vmatprep.subr.mxu0 0.0
      %783 = vmatpush2.xpose.msra.mxu0 0.0
      %784 = vmatprep.subr.mxu0 0.0
      %785 = vmatpush2.xpose.msra.mxu0 0.0
      %786 = vmatprep.subr.mxu0 0.0
      %787 = vmatpush2.xpose.msra.mxu0 0.0
      %788 = vmatprep.subr.mxu0 0.0
      %789 = vmatpush2.xpose.msra.mxu0 0.0
      %790 = vmatprep.subr.mxu0 0.0
      %791 = vmatpush2.xpose.msra.mxu0 0.0
      %792 = vmatprep.subr.mxu0 0.0
      %793 = vmatpush2.xpose.msra.mxu0 0.0
      %794 = vmatprep.subr.mxu0 0.0
      %795 = vmatpush2.xpose.msra.mxu0 0.0
      %796 = vmatprep.subr.mxu0 0.0
      %797 = vmatpush2.xpose.msra.mxu0 0.0
      %798 = vmatprep.subr.mxu0 0.0
      %799 = vmatpush2.xpose.msra.mxu0 0.0
      %800 = vmatprep.subr.mxu0 0.0
      %801 = vmatpush2.xpose.msra.mxu0 0.0
      %802 = vmatprep.subr.mxu0 0.0
      %803 = vmatpush2.xpose.msra.mxu0 0.0
      %804 = vmatprep.subr.mxu0 0.0
      %805 = vmatpush2.xpose.msra.mxu0 0.0
      %806 = vmatprep.subr.mxu0 0.0
      %807 = vmatpush2.xpose.msra.mxu0 0.0
      %808 = vmatprep.subr.mxu0 0.0
      %809 = vmatpush2.xpose.msra.mxu0 0.0
      %810 = vmatprep.subr.mxu0 0.0
      %811 = vmatpush2.xpose.msra.mxu0 0.0
      %812 = vmatprep.mubr.f32.mxu0 0.0
      %v813 = vand.u32 %v264, 4294901760
      %814 = vmatmul.mubr.f32.gmra.mxu0 %v813
      %v815 = vpop.f32.mrf.mxu0
      %v816 = vadd.f32 %v697, %v815
      %v817 = vpop.f32.mrf.mxu0
      %818 = vdwg.mxu0
      %819 = vmatprep.subr.mxu0 0.0
      %v820 = vand.u32 %v262, 4294901760
      %821 = vmatpush1.xpose.msra.mxu0 %v820
      %822 = vmatprep.subr.mxu0 0.0
      %v823 = vand.u32 %v261, 4294901760
      %824 = vmatpush1.xpose.msra.mxu0 %v823
      %825 = vmatprep.subr.mxu0 0.0
      %v826 = vand.u32 %v260, 4294901760
      %827 = vmatpush1.xpose.msra.mxu0 %v826
      %828 = vmatprep.subr.mxu0 0.0
      %v829 = vand.u32 %v259, 4294901760
      %830 = vmatpush1.xpose.msra.mxu0 %v829
      %831 = vmatprep.subr.mxu0 0.0
      %v832 = vand.u32 %v258, 4294901760
      %833 = vmatpush1.xpose.msra.mxu0 %v832
      %834 = vmatprep.subr.mxu0 0.0
      %v835 = vand.u32 %v257, 4294901760
      %836 = vmatpush1.xpose.msra.mxu0 %v835
      %837 = vmatprep.subr.mxu0 0.0
      %v838 = vand.u32 %v256, 4294901760
      %839 = vmatpush1.xpose.msra.mxu0 %v838
      %840 = vmatprep.subr.mxu0 0.0
      %v841 = vand.u32 %v255, 4294901760
      %842 = vmatpush1.xpose.msra.mxu0 %v841
      %843 = vmatprep.subr.mxu0 0.0
      %v844 = vand.u32 %v254, 4294901760
      %845 = vmatpush1.xpose.msra.mxu0 %v844
      %846 = vmatprep.subr.mxu0 0.0
      %v847 = vand.u32 %v253, 4294901760
      %848 = vmatpush1.xpose.msra.mxu0 %v847
      %849 = vmatprep.subr.mxu0 0.0
      %v850 = vand.u32 %v252, 4294901760
      %851 = vmatpush1.xpose.msra.mxu0 %v850
      %852 = vmatprep.subr.mxu0 0.0
      %v853 = vand.u32 %v251, 4294901760
      %854 = vmatpush1.xpose.msra.mxu0 %v853
      %855 = vmatprep.subr.mxu0 0.0
      %v856 = vand.u32 %v250, 4294901760
      %857 = vmatpush1.xpose.msra.mxu0 %v856
      %858 = vmatprep.subr.mxu0 0.0
      %v859 = vand.u32 %v249, 4294901760
      %860 = vmatpush1.xpose.msra.mxu0 %v859
      %861 = vmatprep.subr.mxu0 0.0
      %v862 = vand.u32 %v248, 4294901760
      %863 = vmatpush1.xpose.msra.mxu0 %v862
      %864 = vmatprep.subr.mxu0 0.0
      %v865 = vand.u32 %v247, 4294901760
      %866 = vmatpush1.xpose.msra.mxu0 %v865
      %867 = vmatprep.subr.mxu0 0.0
      %868 = vmatpush2.xpose.msra.mxu0 0.0
      %869 = vmatprep.subr.mxu0 0.0
      %870 = vmatpush2.xpose.msra.mxu0 0.0
      %871 = vmatprep.subr.mxu0 0.0
      %872 = vmatpush2.xpose.msra.mxu0 0.0
      %873 = vmatprep.subr.mxu0 0.0
      %874 = vmatpush2.xpose.msra.mxu0 0.0
      %875 = vmatprep.subr.mxu0 0.0
      %876 = vmatpush2.xpose.msra.mxu0 0.0
      %877 = vmatprep.subr.mxu0 0.0
      %878 = vmatpush2.xpose.msra.mxu0 0.0
      %879 = vmatprep.subr.mxu0 0.0
      %880 = vmatpush2.xpose.msra.mxu0 0.0
      %881 = vmatprep.subr.mxu0 0.0
      %882 = vmatpush2.xpose.msra.mxu0 0.0
      %883 = vmatprep.subr.mxu0 0.0
      %884 = vmatpush2.xpose.msra.mxu0 0.0
      %885 = vmatprep.subr.mxu0 0.0
      %886 = vmatpush2.xpose.msra.mxu0 0.0
      %887 = vmatprep.subr.mxu0 0.0
      %888 = vmatpush2.xpose.msra.mxu0 0.0
      %889 = vmatprep.subr.mxu0 0.0
      %890 = vmatpush2.xpose.msra.mxu0 0.0
      %891 = vmatprep.subr.mxu0 0.0
      %892 = vmatpush2.xpose.msra.mxu0 0.0
      %893 = vmatprep.subr.mxu0 0.0
      %894 = vmatpush2.xpose.msra.mxu0 0.0
      %895 = vmatprep.subr.mxu0 0.0
      %896 = vmatpush2.xpose.msra.mxu0 0.0
      %897 = vmatprep.subr.mxu0 0.0
      %898 = vmatpush2.xpose.msra.mxu0 0.0
      %899 = vmatprep.mubr.f32.mxu0 0.0
      %v900 = vand.u32 %v264, 4294901760
      %901 = vmatmul.mubr.f32.gmra.mxu0 %v900
      %v902 = vpop.f32.mrf.mxu0
      %v903 = vadd.f32 %v816, %v902
      %v904 = vpop.f32.mrf.mxu0
      %905 = vdwg.mxu0
      %v906 = vadd.f32 %v263, %v903
      %907 = vst [vmem:[#allocation3] sm:$0xff] %v906
    $region17: #{tpu_custom_call.1} parent=1 // pred_fallthru
      _
    // Predicated region
    $region18: #{tpu_custom_call.1} parent=1 // pred_check
      %p908 = pneg %p117
    $region19: #{tpu_custom_call.1} parent=1 // pred_check_branch
      %910 = sbr.rel (%p908) target = $region21
    $region20: #{tpu_custom_call.1} parent=1 // pred_region
      %v911 = vld [vmem:[#allocation3] sm:$0xff]
      %v912 = vmax.f32 %v911, 1.0
      %v913 = vrcp.pop %v912
      %v914 = vmul.f32 1.0, %v913
      %v916 = vrot.slane %v914, 4
      %v918 = vmul.f32 %v911, %v916
      %v919 = vrot.slane %v914, 3
      %v921 = vmul.f32 %v911, %v919
      %v922 = vmul.f32 %v918, 0.15994334
      %v923 = vmul.f32 %v922, %v922
      %v925 = vrot.slane %v923, 7
      %v927 = vadd.f32 %v921, %v925
      %v928 = vmul.f32 %v927, 0.58669245
      %v930 = vrot.slane %v928, 7
      %v932 = vsub.f32 %v911, %v930
      %v934 = vrot.slane %v918, 6
      %v936 = vsub.f32 %v932, %v934
      %v937 = vmul.f32 %v936, 0.16596459
      %v938 = vmul.f32 %v918, -0.089175865
      %v939 = vmul.f32 %v938, %v938
      %v941 = vrot.slane %v921, 1
      %v943 = vmul.f32 %v939, %v941
      %v945 = vrot.slane %v943, 5
      %v947 = vsub.f32 %v911, %v945
      %v948 = vrot.slane %v918, 5
      %v950 = vsub.f32 %v947, %v948
      %v951 = vrot.slane %v921, 6
      %v953 = vadd.f32 %v950, %v951
      %v954 = vmul.f32 %v953, -0.05459863
      %v956 = vrot.slane %v911, 1
      %v958 = vadd.f32 %v921, %v956
      %v959 = vmul.f32 %v958, 0.05392959
      %v960 = vmul.f32 %v918, %v918
      %v961 = vadd.f32 %v960, 63.129406
      %v962 = vrcp.pop %v961
      %v963 = vmul.f32 12.305774, %v962
      %v964 = vmul.f32 %v918, %v963
      %v965 = vmul.f32 %v937, 1.897956
      %v967 = vrot.slane %v964, 6
      %v969 = vadd.f32 %v965, %v967
      %v971 = vrot.slane %v959, 7
      %v973 = vsub.f32 %v969, %v971
      %v974 = vmul.f32 %v973, -0.18549965
      %v975 = vrot.slane %v959, 6
      %v977 = vadd.f32 %v954, %v975
      %v979 = vrot.slane %v977, 1
      %v981 = vsub.f32 %v974, %v979
      %v982 = vmul.f32 %v981, 1.3644514
      %v983 = vmul.f32 %v937, -0.8037861
      %v985 = vrot.slane %v954, 1
      %v987 = vsub.f32 %v983, %v985
      %v988 = vmul.f32 %v964, 1.2175907
      %v989 = vrot.slane %v959, 1
      %v991 = vadd.f32 %v988, %v989
      %v993 = vrot.slane %v991, 6
      %v995 = vadd.f32 %v987, %v993
      %v997 = vrot.slane %v982, 2
      %v1000 = vrot.slane %v995, 1
      %vm1002 = vcmask 1040384
      %v1003 = vsel %vm1002, %v997, %v1000
      %1004 = vst [vmem:[#allocation7] sm:$0x3] %v1003
    $region21: #{tpu_custom_call.1} parent=1 // pred_fallthru
      _
    // Predicated region
    $region22: #{tpu_custom_call.1} parent=1 // pred_check
      _
    $region23: #{tpu_custom_call.1} parent=1 // pred_check_branch
      %1006 = sbr.rel (0) target = $region25
    $region24: #{tpu_custom_call.1} parent=1 // pred_region
      %s1008 = ssub.s32 32, 32
      %1009 = vsyncadd [#allocation8], %s1008
      %s1011 = sshll.u32 [#allocation7], 4
      %s1012 = int_to_ptr.vmem [resolvable:$true] %s1011
      %1014 = dma.vmem_to_hbm [thread:$0]  %s1012, 32, %s4, [#allocation8]
    $region25: #{tpu_custom_call.1} parent=1 // pred_fallthru
      _
    // Predicated region
    $region26: #{tpu_custom_call.1} parent=1 // pred_check
      _
    $region27: #{tpu_custom_call.1} parent=1 // pred_check_branch
      %1016 = sbr.rel (0) target = $region29
    $region28: #{tpu_custom_call.1} parent=1 // pred_region
      %1017 = dma.done [#allocation8], 32
    $region29: #{tpu_custom_call.1} parent=1 // pred_fallthru
      _
    %1018 = vsyncpa [#allocation8], 1

</llo_original>
